<compile_context>
chip_gen: v7x
topology: tpu7x:2x2x1
jax: 0.10.0
libtpu: 0.0.40
codegen_flags: <defaults>
</compile_context>

<pallas_src>
import math

import jax
import jax.numpy as jnp
from jax.experimental import pallas as pl
from jax.experimental.pallas import tpu as pltpu

FEATURES = 32
CONTEXT_FEATURES = 16
TB_MAX = 4096  # max batch rows per grid step (multiple of 128)


def _round_up(n, m):
    return ((n + m - 1) // m) * m


def residual_block_kernel(x_ref, ctx_ref, w0_ref, b0_ref, wc_ref, bc_ref,
                          w1a_ref, w1b_ref, b1_ref, out_ref):
    x = x_ref[...]                                                 # (TB, F) f32

    # temps = linear_layers[0](activation(inputs))
    h = jnp.dot(jnp.maximum(x, 0.0).astype(jnp.bfloat16), w0_ref[...],
                preferred_element_type=jnp.float32) + b0_ref[...]

    # context_temp = activation(context_layer(context))
    c = jnp.maximum(
        jnp.dot(ctx_ref[...].astype(jnp.bfloat16), wc_ref[...],
                preferred_element_type=jnp.float32) + bc_ref[...],
        0.0)

    # temps = cat((temps, context_temp), dim=1); temps = activation(temps)
    # temps = linear_layers[1](temps)   (dropout p=0.0, no batch_norm -> identity)
    # relu(c) == c (already non-negative); W1 is pre-split into its two halves,
    # so the concat never needs to be materialized.
    t = (jnp.dot(jnp.maximum(h, 0.0).astype(jnp.bfloat16), w1a_ref[...],
                 preferred_element_type=jnp.float32)
         + jnp.dot(c.astype(jnp.bfloat16), w1b_ref[...],
                   preferred_element_type=jnp.float32)
         + b1_ref[...])

    # return inputs + temps   (residual add in exact f32)
    out_ref[...] = x + t


@jax.jit
def residual_block(x, ctx, kparams):
    n, f = x.shape
    c = ctx.shape[1]

    # >= 2 grid steps (v7x has 2 TensorCores; v5e/v6e want >=2 for pipelining),
    # tile rounded to 128 rows so batch padding is at most one small sliver.
    num_tiles = max(2, pl.cdiv(_round_up(n, 128), TB_MAX))
    tb = _round_up(pl.cdiv(n, num_tiles), 128)
    npad = tb * num_tiles

    if npad != n:
        x_in = jnp.pad(x, ((0, npad - n), (0, 0)))
        ctx_in = jnp.pad(ctx, ((0, npad - n), (0, 0)))
    else:  # common case (batch a multiple of the tile): zero extra HBM passes
        x_in, ctx_in = x, ctx

    flops = npad * 2 * f * (f + c + 2 * f)
    bytes_accessed = (4 * npad * (2 * f + c)                # x in, out, ctx in (f32)
                      + 2 * (f * f + c * f + 2 * f * f)     # bf16 weights
                      + 4 * 3 * f)                          # f32 biases

    out = pl.pallas_call(
        residual_block_kernel,
        out_shape=jax.ShapeDtypeStruct((npad, f), jnp.float32),
        grid_spec=pltpu.PrefetchScalarGridSpec(
            num_scalar_prefetch=0,
            grid=(num_tiles,),
            in_specs=[
                pl.BlockSpec((tb, f), lambda i: (i, 0)),      # x tile (native layout)
                pl.BlockSpec((tb, c), lambda i: (i, 0)),      # context tile
                pl.BlockSpec((f, f), lambda i: (0, 0)),       # W0^T  (VMEM resident)
                pl.BlockSpec((1, f), lambda i: (0, 0)),       # b0
                pl.BlockSpec((c, f), lambda i: (0, 0)),       # Wc^T
                pl.BlockSpec((1, f), lambda i: (0, 0)),       # bc
                pl.BlockSpec((f, f), lambda i: (0, 0)),       # W1[:, :F]^T
                pl.BlockSpec((f, f), lambda i: (0, 0)),       # W1[:, F:]^T
                pl.BlockSpec((1, f), lambda i: (0, 0)),       # b1
            ],
            out_specs=pl.BlockSpec((tb, f), lambda i: (i, 0)),
        ),
        compiler_params=pltpu.CompilerParams(
            dimension_semantics=("parallel",),                # v7x: 2 TCs split the batch grid
            vmem_limit_bytes=32 * 1024 * 1024),               # safe for v5e's smaller default
        cost_estimate=pl.CostEstimate(flops=flops, transcendentals=0,
                                      bytes_accessed=bytes_accessed),
    )(x_in, ctx_in, kparams["w0t"], kparams["b0"], kparams["wct"],
      kparams["bc"], kparams["w1at"], kparams["w1bt"], kparams["b1"])

    return out if npad == n else out[:n]


# ----------------------------- parameters ---------------------------------

def _linear_init(key, out_features, in_features):
    """Deterministic stand-in for PyTorch's default nn.Linear init."""
    kw, kb = jax.random.split(key)
    bound = 1.0 / math.sqrt(in_features)
    w = jax.random.uniform(kw, (out_features, in_features), jnp.float32, -bound, bound)
    b = jax.random.uniform(kb, (out_features,), jnp.float32, -bound, bound)
    return w, b


def init_params(key):
    k0, kc, k1 = jax.random.split(key, 3)
    w0, b0 = _linear_init(k0, FEATURES, FEATURES)                 # linear_layers[0]
    wc, bc = _linear_init(kc, FEATURES, CONTEXT_FEATURES)         # context_layer
    # TODO(synk): the PyTorch __init__ declares linear_layers[1] as
    # Linear(features, features), but forward() feeds it the (batch, 2*features)
    # concat (a latent shape bug in the reference); we widen its input dim to
    # 2*features so the forward as written runs.
    kw, kb = jax.random.split(k1)
    # zero_initialization=True -> uniform(-1e-3, 1e-3) on the last layer.
    w1 = jax.random.uniform(kw, (FEATURES, 2 * FEATURES), jnp.float32, -1e-3, 1e-3)
    b1 = jax.random.uniform(kb, (FEATURES,), jnp.float32, -1e-3, 1e-3)
    return dict(w0=w0, b0=b0, wc=wc, bc=bc, w1=w1, b1=b1)


def prepare_params(params):
    """One-time conversion to kernel-ready layout (done OUTSIDE the jitted call).

    Weights go to (in, out) bf16 so the kernel computes X @ W^T as a plain
    dot; W1 is pre-split into its two F-wide halves so the concat never needs
    a staging buffer.  Biases become f32 (1, F) rows for sublane broadcasting.
    """
    f = FEATURES
    return dict(
        w0t=params["w0"].T.astype(jnp.bfloat16),                  # (F, F)
        b0=params["b0"].reshape(1, -1).astype(jnp.float32),       # (1, F)
        wct=params["wc"].T.astype(jnp.bfloat16),                  # (C, F)
        bc=params["bc"].reshape(1, -1).astype(jnp.float32),       # (1, F)
        w1at=params["w1"][:, :f].T.astype(jnp.bfloat16),          # (F, F)
        w1bt=params["w1"][:, f:].T.astype(jnp.bfloat16),          # (F, F)
        b1=params["b1"].reshape(1, -1).astype(jnp.float32),       # (1, F)
    )


def residual_block_ref(x, ctx, params):
    """Pure-JAX f32 reference of the same forward pass (for validation)."""
    h = jnp.maximum(x, 0.0)
    h = h @ params["w0"].T + params["b0"]
    c = jnp.maximum(ctx @ params["wc"].T + params["bc"], 0.0)
    t = jnp.concatenate([h, c], axis=1)
    t = jnp.maximum(t, 0.0)
    t = t @ params["w1"].T + params["b1"]
    return x + t


if __name__ == "__main__":
    key = jax.random.PRNGKey(0)
    kx, kc, kp = jax.random.split(key, 3)

    params = init_params(kp)
    kparams = prepare_params(params)

    # Small, module-consistent shapes: batch=256, features=32, context=16.
    # (256 rows -> grid=(2,), tb=128, no batch padding, no wrapper passes.)
    N = 256
    x = jax.random.normal(kx, (N, FEATURES), jnp.float32)
    ctx = jax.random.normal(kc, (N, CONTEXT_FEATURES), jnp.float32)

    out = jax.block_until_ready(residual_block(x, ctx, kparams))
    ref = residual_block_ref(x, ctx, params)
    assert out.shape == (N, FEATURES)
    assert jnp.allclose(out, ref, atol=2e-3, rtol=2e-3), \
        float(jnp.max(jnp.abs(out - ref)))

    # Tiny batch (exercises the batch-padding / output-slicing path).
    Ns = 8
    outs = jax.block_until_ready(residual_block(x[:Ns], ctx[:Ns], kparams))
    refs = residual_block_ref(x[:Ns], ctx[:Ns], params)
    assert outs.shape == (Ns, FEATURES)
    assert jnp.allclose(outs, refs, atol=2e-3, rtol=2e-3)

    print("KERNEL_OK")
</pallas_src>

<mosaic_0001>
module attributes {stable_mosaic.version = 11 : i64} {
  func.func @residual_block_kernel(%arg0: i32, %arg1: memref<128x32xf32, #tpu.memory_space<vmem>>, %arg2: memref<128x16xf32, #tpu.memory_space<vmem>>, %arg3: memref<32x32xbf16, #tpu.memory_space<vmem>>, %arg4: memref<1x32xf32, #tpu.memory_space<vmem>>, %arg5: memref<16x32xbf16, #tpu.memory_space<vmem>>, %arg6: memref<1x32xf32, #tpu.memory_space<vmem>>, %arg7: memref<32x32xbf16, #tpu.memory_space<vmem>>, %arg8: memref<32x32xbf16, #tpu.memory_space<vmem>>, %arg9: memref<1x32xf32, #tpu.memory_space<vmem>>, %arg10: memref<128x32xf32, #tpu.memory_space<vmem>>) attributes {dimension_semantics = [#tpu.dimension_semantics<parallel>], iteration_bounds = array<i64: 2>, scalar_prefetch = 0 : i64, scratch_operands = 0 : i64, tpu.core_type = #tpu.core_type<tc>, window_params = [{transform_indices = @transform_0, window_bounds = array<i64: 128, 32>}, {transform_indices = @transform_1, window_bounds = array<i64: 128, 16>}, {pipeline_mode = #tpu.pipeline_mode<synchronous>, transform_indices = @transform_2, window_bounds = array<i64: 32, 32>}, {pipeline_mode = #tpu.pipeline_mode<synchronous>, transform_indices = @transform_3, window_bounds = array<i64: 1, 32>}, {pipeline_mode = #tpu.pipeline_mode<synchronous>, transform_indices = @transform_4, window_bounds = array<i64: 16, 32>}, {pipeline_mode = #tpu.pipeline_mode<synchronous>, transform_indices = @transform_5, window_bounds = array<i64: 1, 32>}, {pipeline_mode = #tpu.pipeline_mode<synchronous>, transform_indices = @transform_6, window_bounds = array<i64: 32, 32>}, {pipeline_mode = #tpu.pipeline_mode<synchronous>, transform_indices = @transform_7, window_bounds = array<i64: 32, 32>}, {pipeline_mode = #tpu.pipeline_mode<synchronous>, transform_indices = @transform_8, window_bounds = array<i64: 1, 32>}, {transform_indices = @transform_9, window_bounds = array<i64: 128, 32>}]} {
    %c0 = arith.constant 0 : index
    %c0_0 = arith.constant 0 : index
    %0 = vector.load %arg1[%c0, %c0_0] : memref<128x32xf32, #tpu.memory_space<vmem>>, vector<128x32xf32>
    %cst = arith.constant 0.000000e+00 : f32
    %1 = vector.broadcast %cst : f32 to vector<128x32xf32>
    %2 = arith.maximumf %0, %1 : vector<128x32xf32>
    %3 = arith.truncf %2 : vector<128x32xf32> to vector<128x32xbf16>
    %c0_1 = arith.constant 0 : index
    %c0_2 = arith.constant 0 : index
    %4 = vector.load %arg3[%c0_1, %c0_2] : memref<32x32xbf16, #tpu.memory_space<vmem>>, vector<32x32xbf16>
    %cst_3 = arith.constant dense<0.000000e+00> : vector<128x32xf32>
    %5 = tpu.matmul %3, %4, %cst_3 {dimension_numbers = #tpu.dot_dimension_numbers<[1], [0], [0], [1], [0, 0, 1, 1], [], []>} : vector<128x32xbf16>, vector<32x32xbf16>, vector<128x32xf32> -> vector<128x32xf32>
    %c0_4 = arith.constant 0 : index
    %c0_5 = arith.constant 0 : index
    %6 = vector.load %arg4[%c0_4, %c0_5] : memref<1x32xf32, #tpu.memory_space<vmem>>, vector<1x32xf32>
    %7 = vector.broadcast %6 : vector<1x32xf32> to vector<128x32xf32>
    %8 = arith.addf %5, %7 : vector<128x32xf32>
    %c0_6 = arith.constant 0 : index
    %c0_7 = arith.constant 0 : index
    %9 = vector.load %arg2[%c0_6, %c0_7] : memref<128x16xf32, #tpu.memory_space<vmem>>, vector<128x16xf32>
    %10 = arith.truncf %9 : vector<128x16xf32> to vector<128x16xbf16>
    %c0_8 = arith.constant 0 : index
    %c0_9 = arith.constant 0 : index
    %11 = vector.load %arg5[%c0_8, %c0_9] : memref<16x32xbf16, #tpu.memory_space<vmem>>, vector<16x32xbf16>
    %cst_10 = arith.constant dense<0.000000e+00> : vector<128x32xf32>
    %12 = tpu.matmul %10, %11, %cst_10 {dimension_numbers = #tpu.dot_dimension_numbers<[1], [0], [0], [1], [0, 0, 1, 1], [], []>} : vector<128x16xbf16>, vector<16x32xbf16>, vector<128x32xf32> -> vector<128x32xf32>
    %c0_11 = arith.constant 0 : index
    %c0_12 = arith.constant 0 : index
    %13 = vector.load %arg6[%c0_11, %c0_12] : memref<1x32xf32, #tpu.memory_space<vmem>>, vector<1x32xf32>
    %14 = vector.broadcast %13 : vector<1x32xf32> to vector<128x32xf32>
    %15 = arith.addf %12, %14 : vector<128x32xf32>
    %cst_13 = arith.constant 0.000000e+00 : f32
    %16 = vector.broadcast %cst_13 : f32 to vector<128x32xf32>
    %17 = arith.maximumf %15, %16 : vector<128x32xf32>
    %cst_14 = arith.constant 0.000000e+00 : f32
    %18 = vector.broadcast %cst_14 : f32 to vector<128x32xf32>
    %19 = arith.maximumf %8, %18 : vector<128x32xf32>
    %20 = arith.truncf %19 : vector<128x32xf32> to vector<128x32xbf16>
    %c0_15 = arith.constant 0 : index
    %c0_16 = arith.constant 0 : index
    %21 = vector.load %arg7[%c0_15, %c0_16] : memref<32x32xbf16, #tpu.memory_space<vmem>>, vector<32x32xbf16>
    %cst_17 = arith.constant dense<0.000000e+00> : vector<128x32xf32>
    %22 = tpu.matmul %20, %21, %cst_17 {dimension_numbers = #tpu.dot_dimension_numbers<[1], [0], [0], [1], [0, 0, 1, 1], [], []>} : vector<128x32xbf16>, vector<32x32xbf16>, vector<128x32xf32> -> vector<128x32xf32>
    %23 = arith.truncf %17 : vector<128x32xf32> to vector<128x32xbf16>
    %c0_18 = arith.constant 0 : index
    %c0_19 = arith.constant 0 : index
    %24 = vector.load %arg8[%c0_18, %c0_19] : memref<32x32xbf16, #tpu.memory_space<vmem>>, vector<32x32xbf16>
    %cst_20 = arith.constant dense<0.000000e+00> : vector<128x32xf32>
    %25 = tpu.matmul %23, %24, %cst_20 {dimension_numbers = #tpu.dot_dimension_numbers<[1], [0], [0], [1], [0, 0, 1, 1], [], []>} : vector<128x32xbf16>, vector<32x32xbf16>, vector<128x32xf32> -> vector<128x32xf32>
    %26 = arith.addf %22, %25 : vector<128x32xf32>
    %c0_21 = arith.constant 0 : index
    %c0_22 = arith.constant 0 : index
    %27 = vector.load %arg9[%c0_21, %c0_22] : memref<1x32xf32, #tpu.memory_space<vmem>>, vector<1x32xf32>
    %28 = vector.broadcast %27 : vector<1x32xf32> to vector<128x32xf32>
    %29 = arith.addf %26, %28 : vector<128x32xf32>
    %30 = arith.addf %0, %29 : vector<128x32xf32>
    %c0_23 = arith.constant 0 : index
    %c0_24 = arith.constant 0 : index
    %31 = vector.load %arg10[%c0_23, %c0_24] : memref<128x32xf32, #tpu.memory_space<vmem>>, vector<128x32xf32>
    tpu.vector_store %arg10[%c0_23, %c0_24], %30 {strides = array<i32>} : memref<128x32xf32, #tpu.memory_space<vmem>>, vector<128x32xf32>,
    return
  }
  func.func @transform_0(%arg0: i32) -> (i32, i32) {
    %c0_i32 = arith.constant 0 : i32
    %c0_i32_0 = arith.constant 0 : i32
    return %arg0, %c0_i32 : i32, i32
  }
  func.func @transform_1(%arg0: i32) -> (i32, i32) {
    %c0_i32 = arith.constant 0 : i32
    %c0_i32_0 = arith.constant 0 : i32
    return %arg0, %c0_i32 : i32, i32
  }
  func.func @transform_2(%arg0: i32) -> (i32, i32) {
    %c0_i32 = arith.constant 0 : i32
    %c0_i32_0 = arith.constant 0 : i32
    %c0_i32_1 = arith.constant 0 : i32
    return %c0_i32, %c0_i32_0 : i32, i32
  }
  func.func @transform_3(%arg0: i32) -> (i32, i32) {
    %c0_i32 = arith.constant 0 : i32
    %c0_i32_0 = arith.constant 0 : i32
    %c0_i32_1 = arith.constant 0 : i32
    return %c0_i32, %c0_i32_0 : i32, i32
  }
  func.func @transform_4(%arg0: i32) -> (i32, i32) {
    %c0_i32 = arith.constant 0 : i32
    %c0_i32_0 = arith.constant 0 : i32
    %c0_i32_1 = arith.constant 0 : i32
    return %c0_i32, %c0_i32_0 : i32, i32
  }
  func.func @transform_5(%arg0: i32) -> (i32, i32) {
    %c0_i32 = arith.constant 0 : i32
    %c0_i32_0 = arith.constant 0 : i32
    %c0_i32_1 = arith.constant 0 : i32
    return %c0_i32, %c0_i32_0 : i32, i32
  }
  func.func @transform_6(%arg0: i32) -> (i32, i32) {
    %c0_i32 = arith.constant 0 : i32
    %c0_i32_0 = arith.constant 0 : i32
    %c0_i32_1 = arith.constant 0 : i32
    return %c0_i32, %c0_i32_0 : i32, i32
  }
  func.func @transform_7(%arg0: i32) -> (i32, i32) {
    %c0_i32 = arith.constant 0 : i32
    %c0_i32_0 = arith.constant 0 : i32
    %c0_i32_1 = arith.constant 0 : i32
    return %c0_i32, %c0_i32_0 : i32, i32
  }
  func.func @transform_8(%arg0: i32) -> (i32, i32) {
    %c0_i32 = arith.constant 0 : i32
    %c0_i32_0 = arith.constant 0 : i32
    %c0_i32_1 = arith.constant 0 : i32
    return %c0_i32, %c0_i32_0 : i32, i32
  }
  func.func @transform_9(%arg0: i32) -> (i32, i32) {
    %c0_i32 = arith.constant 0 : i32
    %c0_i32_0 = arith.constant 0 : i32
    return %arg0, %c0_i32 : i32, i32
  }
}

</mosaic_0001>

<llo_original>
// kernel: residual_block.1
$region0: #{residual_block.1}
  #allocation0 [shape = 'u32[]', space=smem, size = 0x4, offset = 0x4, fixed_abs, tag = 'smem constant byte address 0x4 - core index']
  #allocation1 [shape = 'u32[144,128]{1,0:T(1,128)}', space=vmem, size = 0x12000, scoped, tag = 'internal scratch']
  %s0 = inlined_call_operand.vmem [shape: f32[256,32], index: 0, kind: input, shape index: {}]
  %s1 = inlined_call_operand.vmem [shape: f32[256,16], index: 1, kind: input, shape index: {}]
  %s2 = inlined_call_operand.vmem [shape: bf16[32,32], index: 2, kind: input, shape index: {}]
  %s3 = inlined_call_operand.vmem [shape: f32[1,32], index: 3, kind: input, shape index: {}]
  %s4 = inlined_call_operand.vmem [shape: bf16[16,32], index: 4, kind: input, shape index: {}]
  %s5 = inlined_call_operand.vmem [shape: f32[1,32], index: 5, kind: input, shape index: {}]
  %s6 = inlined_call_operand.vmem [shape: bf16[32,32], index: 6, kind: input, shape index: {}]
  %s7 = inlined_call_operand.vmem [shape: bf16[32,32], index: 7, kind: input, shape index: {}]
  %s8 = inlined_call_operand.vmem [shape: f32[1,32], index: 8, kind: input, shape index: {}]
  %s9 = inlined_call_operand.vmem [shape: f32[256,32], index: 9, kind: output, shape index: {}]
  %s10 = sld [smem:[#allocation0]]
  $region69: #{residual_block.1} parent=0
    _
  %s12 = ssub.s32 1, %s10
  %s13 = scalar_select 0, %s12, %s10
  loop: start=0, step=1, limit=4
  $region2: #{residual_block.1} parent=0 // loop_pre_header
    _
  $region3: #{residual_block.1} parent=0 // loop_header
    %s15 = sphi 0, %s19
    %p16 = scmp.ge.s32.totalorder %s15, 4
    %s25 = sphi 0, %s27
    %s28 = sphi 0, %s25
    %s29 = sphi 0, %s28
    %s45 = sphi 0, %s29
    %s51 = sphi 0, %s53
    %s54 = sphi 0, %s51
    %s55 = sphi 0, %s54
    %s71 = sphi 0, %s55
    %s75 = sphi 0, %s75
    %s77 = sphi 0, %s75
    %s78 = sphi 0, %s77
    %s92 = sphi 0, %s78
    %s96 = sphi 0, %s96
    %s98 = sphi 0, %s96
    %s99 = sphi 0, %s98
    %s113 = sphi 0, %s99
    %s117 = sphi 0, %s117
    %s119 = sphi 0, %s117
    %s120 = sphi 0, %s119
    %s134 = sphi 0, %s120
    %s138 = sphi 0, %s138
    %s140 = sphi 0, %s138
    %s141 = sphi 0, %s140
    %s155 = sphi 0, %s141
    %s159 = sphi 0, %s159
    %s161 = sphi 0, %s159
    %s162 = sphi 0, %s161
    %s176 = sphi 0, %s162
    %s180 = sphi 0, %s180
    %s182 = sphi 0, %s180
    %s183 = sphi 0, %s182
    %s197 = sphi 0, %s183
    %s201 = sphi 0, %s201
    %s203 = sphi 0, %s201
    %s204 = sphi 0, %s203
    %s218 = sphi 0, %s204
    %s224 = sphi 0, %s226
    %s227 = sphi 0, %s224
    %s228 = sphi 0, %s227
    %s244 = sphi 0, %s228
  $region4: #{residual_block.1} parent=0 // loop_header_branch
    %18 = sbr.rel (%p16) target = $region8
  $region5: #{residual_block.1} parent=0 // loop_body
    %s20 = ssub.s32 %s15, 1
    %s21 = ssub.s32 %s15, 2
    %s22 = sadd.s32 %s15, 1
    %s23 = ssub.s32 %s15, %s22
    %p24 = scmp.eq.s32.totalorder %s23, 0
    %s26 = sadd.s32 %s25, 1
    %s27 = scalar_select %p24, %s25, %s26
    %p30 = pneg %p24
    %p31 = scmp.eq.s32.totalorder %s15, 1
    %p32 = por %p30, %p31
    %p33 = scmp.ne.s32.totalorder %s25, %s28
    %p34 = scmp.eq.s32.totalorder %s15, 0
    %p35 = por %p33, %p34
    %p36 = scmp.ne.s32.totalorder %s25, %s28
    %p37 = scmp.eq.s32.totalorder %s20, 1
    %p38 = por %p36, %p37
    %p39 = scmp.ne.s32.totalorder %s28, %s29
    %p40 = scmp.eq.s32.totalorder %s20, 0
    %p41 = por %p39, %p40
    %p42 = scmp.ne.s32.totalorder %s28, %s29
    %p43 = scmp.eq.s32.totalorder %s21, 1
    %p44 = por %p42, %p43
    %p46 = scmp.ne.s32.totalorder %s29, %s45
    %p47 = scmp.eq.s32.totalorder %s21, 0
    %p48 = por %p46, %p47
    %s49 = ssub.s32 %s15, %s22
    %p50 = scmp.eq.s32.totalorder %s49, 0
    %s52 = sadd.s32 %s51, 1
    %s53 = scalar_select %p50, %s51, %s52
    %p56 = pneg %p50
    %p57 = scmp.eq.s32.totalorder %s15, 1
    %p58 = por %p56, %p57
    %p59 = scmp.ne.s32.totalorder %s51, %s54
    %p60 = scmp.eq.s32.totalorder %s15, 0
    %p61 = por %p59, %p60
    %p62 = scmp.ne.s32.totalorder %s51, %s54
    %p63 = scmp.eq.s32.totalorder %s20, 1
    %p64 = por %p62, %p63
    %p65 = scmp.ne.s32.totalorder %s54, %s55
    %p66 = scmp.eq.s32.totalorder %s20, 0
    %p67 = por %p65, %p66
    %p68 = scmp.ne.s32.totalorder %s54, %s55
    %p69 = scmp.eq.s32.totalorder %s21, 1
    %p70 = por %p68, %p69
    %p72 = scmp.ne.s32.totalorder %s55, %s71
    %p73 = scmp.eq.s32.totalorder %s21, 0
    %p74 = por %p72, %p73
    %s76 = sadd.s32 %s75, 1
    %p79 = scmp.eq.s32.totalorder %s15, 1
    %p80 = scmp.ne.s32.totalorder %s75, %s77
    %p81 = scmp.eq.s32.totalorder %s15, 0
    %p82 = por %p80, %p81
    %p83 = scmp.ne.s32.totalorder %s75, %s77
    %p84 = scmp.eq.s32.totalorder %s20, 1
    %p85 = por %p83, %p84
    %p86 = scmp.ne.s32.totalorder %s77, %s78
    %p87 = scmp.eq.s32.totalorder %s20, 0
    %p88 = por %p86, %p87
    %p89 = scmp.ne.s32.totalorder %s77, %s78
    %p90 = scmp.eq.s32.totalorder %s21, 1
    %p91 = por %p89, %p90
    %p93 = scmp.ne.s32.totalorder %s78, %s92
    %p94 = scmp.eq.s32.totalorder %s21, 0
    %p95 = por %p93, %p94
    %s97 = sadd.s32 %s96, 1
    %p100 = scmp.eq.s32.totalorder %s15, 1
    %p101 = scmp.ne.s32.totalorder %s96, %s98
    %p102 = scmp.eq.s32.totalorder %s15, 0
    %p103 = por %p101, %p102
    %p104 = scmp.ne.s32.totalorder %s96, %s98
    %p105 = scmp.eq.s32.totalorder %s20, 1
    %p106 = por %p104, %p105
    %p107 = scmp.ne.s32.totalorder %s98, %s99
    %p108 = scmp.eq.s32.totalorder %s20, 0
    %p109 = por %p107, %p108
    %p110 = scmp.ne.s32.totalorder %s98, %s99
    %p111 = scmp.eq.s32.totalorder %s21, 1
    %p112 = por %p110, %p111
    %p114 = scmp.ne.s32.totalorder %s99, %s113
    %p115 = scmp.eq.s32.totalorder %s21, 0
    %p116 = por %p114, %p115
    %s118 = sadd.s32 %s117, 1
    %p121 = scmp.eq.s32.totalorder %s15, 1
    %p122 = scmp.ne.s32.totalorder %s117, %s119
    %p123 = scmp.eq.s32.totalorder %s15, 0
    %p124 = por %p122, %p123
    %p125 = scmp.ne.s32.totalorder %s117, %s119
    %p126 = scmp.eq.s32.totalorder %s20, 1
    %p127 = por %p125, %p126
    %p128 = scmp.ne.s32.totalorder %s119, %s120
    %p129 = scmp.eq.s32.totalorder %s20, 0
    %p130 = por %p128, %p129
    %p131 = scmp.ne.s32.totalorder %s119, %s120
    %p132 = scmp.eq.s32.totalorder %s21, 1
    %p133 = por %p131, %p132
    %p135 = scmp.ne.s32.totalorder %s120, %s134
    %p136 = scmp.eq.s32.totalorder %s21, 0
    %p137 = por %p135, %p136
    %s139 = sadd.s32 %s138, 1
    %p142 = scmp.eq.s32.totalorder %s15, 1
    %p143 = scmp.ne.s32.totalorder %s138, %s140
    %p144 = scmp.eq.s32.totalorder %s15, 0
    %p145 = por %p143, %p144
    %p146 = scmp.ne.s32.totalorder %s138, %s140
    %p147 = scmp.eq.s32.totalorder %s20, 1
    %p148 = por %p146, %p147
    %p149 = scmp.ne.s32.totalorder %s140, %s141
    %p150 = scmp.eq.s32.totalorder %s20, 0
    %p151 = por %p149, %p150
    %p152 = scmp.ne.s32.totalorder %s140, %s141
    %p153 = scmp.eq.s32.totalorder %s21, 1
    %p154 = por %p152, %p153
    %p156 = scmp.ne.s32.totalorder %s141, %s155
    %p157 = scmp.eq.s32.totalorder %s21, 0
    %p158 = por %p156, %p157
    %s160 = sadd.s32 %s159, 1
    %p163 = scmp.eq.s32.totalorder %s15, 1
    %p164 = scmp.ne.s32.totalorder %s159, %s161
    %p165 = scmp.eq.s32.totalorder %s15, 0
    %p166 = por %p164, %p165
    %p167 = scmp.ne.s32.totalorder %s159, %s161
    %p168 = scmp.eq.s32.totalorder %s20, 1
    %p169 = por %p167, %p168
    %p170 = scmp.ne.s32.totalorder %s161, %s162
    %p171 = scmp.eq.s32.totalorder %s20, 0
    %p172 = por %p170, %p171
    %p173 = scmp.ne.s32.totalorder %s161, %s162
    %p174 = scmp.eq.s32.totalorder %s21, 1
    %p175 = por %p173, %p174
    %p177 = scmp.ne.s32.totalorder %s162, %s176
    %p178 = scmp.eq.s32.totalorder %s21, 0
    %p179 = por %p177, %p178
    %s181 = sadd.s32 %s180, 1
    %p184 = scmp.eq.s32.totalorder %s15, 1
    %p185 = scmp.ne.s32.totalorder %s180, %s182
    %p186 = scmp.eq.s32.totalorder %s15, 0
    %p187 = por %p185, %p186
    %p188 = scmp.ne.s32.totalorder %s180, %s182
    %p189 = scmp.eq.s32.totalorder %s20, 1
    %p190 = por %p188, %p189
    %p191 = scmp.ne.s32.totalorder %s182, %s183
    %p192 = scmp.eq.s32.totalorder %s20, 0
    %p193 = por %p191, %p192
    %p194 = scmp.ne.s32.totalorder %s182, %s183
    %p195 = scmp.eq.s32.totalorder %s21, 1
    %p196 = por %p194, %p195
    %p198 = scmp.ne.s32.totalorder %s183, %s197
    %p199 = scmp.eq.s32.totalorder %s21, 0
    %p200 = por %p198, %p199
    %s202 = sadd.s32 %s201, 1
    %p205 = scmp.eq.s32.totalorder %s15, 1
    %p206 = scmp.ne.s32.totalorder %s201, %s203
    %p207 = scmp.eq.s32.totalorder %s15, 0
    %p208 = por %p206, %p207
    %p209 = scmp.ne.s32.totalorder %s201, %s203
    %p210 = scmp.eq.s32.totalorder %s20, 1
    %p211 = por %p209, %p210
    %p212 = scmp.ne.s32.totalorder %s203, %s204
    %p213 = scmp.eq.s32.totalorder %s20, 0
    %p214 = por %p212, %p213
    %p215 = scmp.ne.s32.totalorder %s203, %s204
    %p216 = scmp.eq.s32.totalorder %s21, 1
    %p217 = por %p215, %p216
    %p219 = scmp.ne.s32.totalorder %s204, %s218
    %p220 = scmp.eq.s32.totalorder %s21, 0
    %p221 = por %p219, %p220
    %s222 = ssub.s32 %s15, %s22
    %p223 = scmp.eq.s32.totalorder %s222, 0
    %s225 = sadd.s32 %s224, 1
    %s226 = scalar_select %p223, %s224, %s225
    %p229 = pneg %p223
    %p230 = scmp.eq.s32.totalorder %s15, 1
    %p231 = por %p229, %p230
    %p232 = scmp.ne.s32.totalorder %s224, %s227
    %p233 = scmp.eq.s32.totalorder %s15, 0
    %p234 = por %p232, %p233
    %p235 = scmp.ne.s32.totalorder %s224, %s227
    %p236 = scmp.eq.s32.totalorder %s20, 1
    %p237 = por %p235, %p236
    %p238 = scmp.ne.s32.totalorder %s227, %s228
    %p239 = scmp.eq.s32.totalorder %s20, 0
    %p240 = por %p238, %p239
    %p241 = scmp.ne.s32.totalorder %s227, %s228
    %p242 = scmp.eq.s32.totalorder %s21, 1
    %p243 = por %p241, %p242
    %p245 = scmp.ne.s32.totalorder %s228, %s244
    %p246 = scmp.eq.s32.totalorder %s21, 0
    %p247 = por %p245, %p246
    %p248 = scmp.le.s32.totalorder 1, %s15
    %p249 = scmp.lt.s32.totalorder %s15, 3
    %p250 = pnand %p248, %p249
    %p251 = pneg %p250
    // Predicated region
    $region9: #{residual_block.1} parent=5 // pred_check
      _
    $region10: #{residual_block.1} parent=5 // pred_check_branch
      %253 = sbr.rel (%p250) target = $region12
    $region11: #{residual_block.1} parent=5 // pred_region
      %s254 = ssub.s32 %s15, 1
      // Predicated region
      $region13: #{residual_block.1} parent=11 // pred_check
        %p255 = pneg %p88
      $region14: #{residual_block.1} parent=11 // pred_check_branch
        %257 = sbr.rel (%p255) target = $region16
      $region15: #{residual_block.1} parent=11 // pred_region
        _
      $region16: #{residual_block.1} parent=11 // pred_fallthru
        _
      // Predicated region
      $region17: #{residual_block.1} parent=11 // pred_check
        %p258 = pneg %p109
      $region18: #{residual_block.1} parent=11 // pred_check_branch
        %260 = sbr.rel (%p258) target = $region20
      $region19: #{residual_block.1} parent=11 // pred_region
        _
      $region20: #{residual_block.1} parent=11 // pred_fallthru
        _
      // Predicated region
      $region21: #{residual_block.1} parent=11 // pred_check
        %p261 = pneg %p130
      $region22: #{residual_block.1} parent=11 // pred_check_branch
        %263 = sbr.rel (%p261) target = $region24
      $region23: #{residual_block.1} parent=11 // pred_region
        _
      $region24: #{residual_block.1} parent=11 // pred_fallthru
        _
      // Predicated region
      $region25: #{residual_block.1} parent=11 // pred_check
        %p264 = pneg %p151
      $region26: #{residual_block.1} parent=11 // pred_check_branch
        %266 = sbr.rel (%p264) target = $region28
      $region27: #{residual_block.1} parent=11 // pred_region
        _
      $region28: #{residual_block.1} parent=11 // pred_fallthru
        _
      // Predicated region
      $region29: #{residual_block.1} parent=11 // pred_check
        %p267 = pneg %p172
      $region30: #{residual_block.1} parent=11 // pred_check_branch
        %269 = sbr.rel (%p267) target = $region32
      $region31: #{residual_block.1} parent=11 // pred_region
        _
      $region32: #{residual_block.1} parent=11 // pred_fallthru
        _
      // Predicated region
      $region33: #{residual_block.1} parent=11 // pred_check
        %p270 = pneg %p193
      $region34: #{residual_block.1} parent=11 // pred_check_branch
        %272 = sbr.rel (%p270) target = $region36
      $region35: #{residual_block.1} parent=11 // pred_region
        _
      $region36: #{residual_block.1} parent=11 // pred_fallthru
        _
      // Predicated region
      $region37: #{residual_block.1} parent=11 // pred_check
        %p273 = pneg %p214
      $region38: #{residual_block.1} parent=11 // pred_check_branch
        %275 = sbr.rel (%p273) target = $region40
      $region39: #{residual_block.1} parent=11 // pred_region
        _
      $region40: #{residual_block.1} parent=11 // pred_fallthru
        _
    $region12: #{residual_block.1} parent=5 // pred_fallthru
      _
    %p276 = scmp.lt.s32.totalorder %s15, 2
    // Predicated region
    $region41: #{residual_block.1} parent=5 // pred_check
      %p277 = pneg %p276
    $region42: #{residual_block.1} parent=5 // pred_check_branch
      %279 = sbr.rel (%p277) target = $region44
    $region43: #{residual_block.1} parent=5 // pred_region
      // Predicated region
      $region45: #{residual_block.1} parent=43 // pred_check
        %p280 = pneg %p35
      $region46: #{residual_block.1} parent=43 // pred_check_branch
        %282 = sbr.rel (%p280) target = $region48
      $region47: #{residual_block.1} parent=43 // pred_region
        %s283 = smul.u32 16, %s15
        %p284 = scmp.lt.s32.totalorder %s283, 31
        %s285 = scalar_select %p284, %s283, 31
        %s286 = smul.addr %s285, 8
        %s287 = scalar_lea.vmem %s0, %s286
        %s288 = smul.u32 16, %s15
      $region48: #{residual_block.1} parent=43 // pred_fallthru
        _
      // Predicated region
      $region49: #{residual_block.1} parent=43 // pred_check
        %p289 = pneg %p61
      $region50: #{residual_block.1} parent=43 // pred_check_branch
        %291 = sbr.rel (%p289) target = $region52
      $region51: #{residual_block.1} parent=43 // pred_region
        %s292 = smul.u32 16, %s15
        %p293 = scmp.lt.s32.totalorder %s292, 31
        %s294 = scalar_select %p293, %s292, 31
        %s295 = smul.addr %s294, 8
        %s296 = scalar_lea.vmem %s1, %s295
        %s297 = smul.u32 16, %s15
      $region52: #{residual_block.1} parent=43 // pred_fallthru
        _
    $region44: #{residual_block.1} parent=5 // pred_fallthru
      _
    %p298 = scmp.le.s32.totalorder 1, %s15
    %p299 = scmp.lt.s32.totalorder %s15, 3
    %p300 = pnand %p298, %p299
    %p301 = pneg %p300
    // Predicated region
    $region53: #{residual_block.1} parent=5 // pred_check
      _
    $region54: #{residual_block.1} parent=5 // pred_check_branch
      %303 = sbr.rel (%p300) target = $region56
    $region55: #{residual_block.1} parent=5 // pred_region
      %s304 = ssub.s32 %s15, 1
      %s305 = smul.u32 16, %s20
      %p306 = scmp.lt.s32.totalorder %s305, 31
      %s307 = scalar_select %p306, %s305, 31
      %s308 = smul.addr %s307, 8
      %s309 = scalar_lea.vmem %s0, %s308
      %p310 = pneg %p41
      %p311 = pneg %p38
      %s312 = smul.u32 16, %s20
      %p313 = scmp.lt.s32.totalorder %s312, 31
      %s314 = scalar_select %p313, %s312, 31
      %s315 = smul.addr %s314, 8
      %s316 = scalar_lea.vmem %s1, %s315
      %p317 = pneg %p67
      %p318 = pneg %p64
      %p319 = pneg %p88
      %p320 = pneg %p85
      %p321 = pneg %p109
      %p322 = pneg %p106
      %p323 = pneg %p130
      %p324 = pneg %p127
      %p325 = pneg %p151
      %p326 = pneg %p148
      %p327 = pneg %p172
      %p328 = pneg %p169
      %p329 = pneg %p193
      %p330 = pneg %p190
      %p331 = pneg %p214
      %p332 = pneg %p211
      %p333 = pneg %p240
      %p334 = pneg %p237
      %s335 = smul.u32 16, %s20
      %p336 = scmp.lt.s32.totalorder %s335, 31
      %s337 = scalar_select %p336, %s335, 31
      %s338 = smul.addr %s337, 8
      %s339 = scalar_lea.vmem %s9, %s338
      %s340 = smul.u32 16, %s20
      %p341 = scmp.lt.s32.totalorder %s340, 31
      %s342 = scalar_select %p341, %s340, 31
      %s343 = smul.addr %s342, 8
      %s344 = scalar_lea.vmem %s0, %s343
      %s345 = smul.u32 16, %s20
      %s346 = smul.u32 16, %s20
      %p347 = scmp.lt.s32.totalorder %s346, 31
      %s348 = scalar_select %p347, %s346, 31
      %s349 = smul.addr %s348, 8
      %s350 = scalar_lea.vmem %s1, %s349
      %s351 = smul.u32 16, %s20
      %s352 = smul.u32 16, %s20
      %p353 = scmp.lt.s32.totalorder %s352, 31
      %s354 = scalar_select %p353, %s352, 31
      %s355 = smul.addr %s354, 8
      %s356 = scalar_lea.vmem %s9, %s355
      %s357 = smul.u32 16, %s20
      %v359 = vld [vmem:[%s344] sm:$0xff]
      %v360 = vld [vmem:[%s344 + $0x8] sm:$0xff]
      %v361 = vld [vmem:[%s344 + $0x10] sm:$0xff]
      %v362 = vld [vmem:[%s344 + $0x18] sm:$0xff]
      %v363 = vld [vmem:[%s344 + $0x20] sm:$0xff]
      %v364 = vld [vmem:[%s344 + $0x28] sm:$0xff]
      %v365 = vld [vmem:[%s344 + $0x30] sm:$0xff]
      %v366 = vld [vmem:[%s344 + $0x38] sm:$0xff]
      %v367 = vld [vmem:[%s344 + $0x40] sm:$0xff]
      %v368 = vld [vmem:[%s344 + $0x48] sm:$0xff]
      %v369 = vld [vmem:[%s344 + $0x50] sm:$0xff]
      %v370 = vld [vmem:[%s344 + $0x58] sm:$0xff]
      %v371 = vld [vmem:[%s344 + $0x60] sm:$0xff]
      %v372 = vld [vmem:[%s344 + $0x68] sm:$0xff]
      %v373 = vld [vmem:[%s344 + $0x70] sm:$0xff]
      %v374 = vld [vmem:[%s344 + $0x78] sm:$0xff]
      %v375 = vmax.f32 %v359, 0.0
      %v376 = vmax.f32 %v360, 0.0
      %v377 = vmax.f32 %v361, 0.0
      %v378 = vmax.f32 %v362, 0.0
      %v379 = vmax.f32 %v363, 0.0
      %v380 = vmax.f32 %v364, 0.0
      %v381 = vmax.f32 %v365, 0.0
      %v382 = vmax.f32 %v366, 0.0
      %v383 = vmax.f32 %v367, 0.0
      %v384 = vmax.f32 %v368, 0.0
      %v385 = vmax.f32 %v369, 0.0
      %v386 = vmax.f32 %v370, 0.0
      %v387 = vmax.f32 %v371, 0.0
      %v388 = vmax.f32 %v372, 0.0
      %v389 = vmax.f32 %v373, 0.0
      %v390 = vmax.f32 %v374, 0.0
      %v391 = vpack.c.bf16 %v376, %v375
      %v392 = vpack.c.bf16 %v378, %v377
      %v393 = vpack.c.bf16 %v380, %v379
      %v394 = vpack.c.bf16 %v382, %v381
      %v395 = vpack.c.bf16 %v384, %v383
      %v396 = vpack.c.bf16 %v386, %v385
      %v397 = vpack.c.bf16 %v388, %v387
      %v398 = vpack.c.bf16 %v390, %v389
      %v399 = vld [vmem:[%s2] sm:$0xf]
      %v400 = vld [vmem:[%s2 + $0x4] sm:$0xf]
      %v401 = vld [vmem:[%s2 + $0x8] sm:$0xf]
      %v402 = vld [vmem:[%s2 + $0xc] sm:$0xf]
      %v403 = vld [vmem:[%s3] sm:$0x1]
      %v405 = vlaneseq
      %v406 = vshrl.u32 %v405, 7
      %v407 = vsub.s32 0, %v406
      %v408 = vrot.slane %v403, %v407
      %v414 = vunpack.c.l.b16 %v399
      %v415 = vunpack.c.l.b16 %v400
      %v416 = vunpack.c.l.b16 %v401
      %v417 = vunpack.c.l.b16 %v402
      %v418 = vpack.c.b16 %v415, %v414
      %v419 = vpack.c.b16 %v417, %v416
      %vm422 = vcmask 261120
      %v424 = vsel %vm422, %v391, 0
      %v427 = vsel %vm422, %v392, 0
      %v430 = vsel %vm422, %v393, 0
      %v433 = vsel %vm422, %v394, 0
      %v436 = vsel %vm422, %v395, 0
      %v439 = vsel %vm422, %v396, 0
      %v442 = vsel %vm422, %v397, 0
      %v445 = vsel %vm422, %v398, 0
      %447 = vmatprep.subr.bf16.mxu0 0
      %448 = vmatpush1.bf16.msra.mxu0 %v418
      %449 = vmatprep.subr.bf16.mxu0 0
      %450 = vmatpush1.bf16.msra.mxu0 %v419
      %451 = vmatprep.subr.bf16.mxu0 0
      %452 = vmatpush1.bf16.msra.mxu0 0
      %453 = vmatprep.subr.bf16.mxu0 0
      %454 = vmatpush1.bf16.msra.mxu0 0
      %455 = vmatprep.subr.bf16.mxu0 0
      %456 = vmatpush1.bf16.msra.mxu0 0
      %457 = vmatprep.subr.bf16.mxu0 0
      %458 = vmatpush1.bf16.msra.mxu0 0
      %459 = vmatprep.subr.bf16.mxu0 0
      %460 = vmatpush1.bf16.msra.mxu0 0
      %461 = vmatprep.subr.bf16.mxu0 0
      %462 = vmatpush1.bf16.msra.mxu0 0
      %463 = vmatprep.subr.bf16.mxu0 0
      %464 = vmatpush1.bf16.msra.mxu0 0
      %465 = vmatprep.subr.bf16.mxu0 0
      %466 = vmatpush1.bf16.msra.mxu0 0
      %467 = vmatprep.subr.bf16.mxu0 0
      %468 = vmatpush1.bf16.msra.mxu0 0
      %469 = vmatprep.subr.bf16.mxu0 0
      %470 = vmatpush1.bf16.msra.mxu0 0
      %471 = vmatprep.subr.bf16.mxu0 0
      %472 = vmatpush1.bf16.msra.mxu0 0
      %473 = vmatprep.subr.bf16.mxu0 0
      %474 = vmatpush1.bf16.msra.mxu0 0
      %475 = vmatprep.subr.bf16.mxu0 0
      %476 = vmatpush1.bf16.msra.mxu0 0
      %477 = vmatprep.subr.bf16.mxu0 0
      %478 = vmatpush1.bf16.msra.mxu0 0
      %479 = vmatprep.mubr.bf16.mxu0 0
      %480 = vmatmul.mubr.bf16.gmra.mrb[0].mxu0 %v424
      %v481 = vpop.f32.mrb[0].mxu0
      %v482 = vadd.f32 %v408, %v481
      %v483 = vpop.f32.mrb[0].mxu0
      %v484 = vpop.f32.mrb[0].mxu0
      %v485 = vadd.f32 %v408, %v484
      %v486 = vpop.f32.mrb[0].mxu0
      %487 = vmatprep.mubr.bf16.mxu0 0
      %488 = vmatmul.mubr.bf16.gmra.mrb[0].mxu0 %v427
      %v489 = vpop.f32.mrb[0].mxu0
      %v490 = vadd.f32 %v408, %v489
      %v491 = vpop.f32.mrb[0].mxu0
      %v492 = vpop.f32.mrb[0].mxu0
      %v493 = vadd.f32 %v408, %v492
      %v494 = vpop.f32.mrb[0].mxu0
      %495 = vmatprep.mubr.bf16.mxu0 0
      %496 = vmatmul.mubr.bf16.gmra.mrb[0].mxu0 %v430
      %v497 = vpop.f32.mrb[0].mxu0
      %v498 = vadd.f32 %v408, %v497
      %v499 = vpop.f32.mrb[0].mxu0
      %v500 = vpop.f32.mrb[0].mxu0
      %v501 = vadd.f32 %v408, %v500
      %v502 = vpop.f32.mrb[0].mxu0
      %503 = vmatprep.mubr.bf16.mxu0 0
      %504 = vmatmul.mubr.bf16.gmra.mrb[0].mxu0 %v433
      %v505 = vpop.f32.mrb[0].mxu0
      %v506 = vadd.f32 %v408, %v505
      %v507 = vpop.f32.mrb[0].mxu0
      %v508 = vpop.f32.mrb[0].mxu0
      %v509 = vadd.f32 %v408, %v508
      %v510 = vpop.f32.mrb[0].mxu0
      %511 = vmatprep.mubr.bf16.mxu0 0
      %512 = vmatmul.mubr.bf16.gmra.mrb[0].mxu0 %v436
      %v513 = vpop.f32.mrb[0].mxu0
      %v514 = vadd.f32 %v408, %v513
      %v515 = vpop.f32.mrb[0].mxu0
      %v516 = vpop.f32.mrb[0].mxu0
      %v517 = vadd.f32 %v408, %v516
      %v518 = vpop.f32.mrb[0].mxu0
      %519 = vmatprep.mubr.bf16.mxu0 0
      %520 = vmatmul.mubr.bf16.gmra.mrb[0].mxu0 %v439
      %v521 = vpop.f32.mrb[0].mxu0
      %v522 = vadd.f32 %v408, %v521
      %v523 = vpop.f32.mrb[0].mxu0
      %v524 = vpop.f32.mrb[0].mxu0
      %v525 = vadd.f32 %v408, %v524
      %v526 = vpop.f32.mrb[0].mxu0
      %527 = vmatprep.mubr.bf16.mxu0 0
      %528 = vmatmul.mubr.bf16.gmra.mrb[0].mxu0 %v442
      %v529 = vpop.f32.mrb[0].mxu0
      %v530 = vadd.f32 %v408, %v529
      %v531 = vpop.f32.mrb[0].mxu0
      %v532 = vpop.f32.mrb[0].mxu0
      %v533 = vadd.f32 %v408, %v532
      %v534 = vpop.f32.mrb[0].mxu0
      %535 = vmatprep.mubr.bf16.mxu0 0
      %536 = vmatmul.mubr.bf16.gmra.mrb[0].mxu0 %v445
      %v537 = vpop.f32.mrb[0].mxu0
      %v538 = vadd.f32 %v408, %v537
      %v539 = vpop.f32.mrb[0].mxu0
      %v540 = vpop.f32.mrb[0].mxu0
      %v541 = vadd.f32 %v408, %v540
      %v542 = vpop.f32.mrb[0].mxu0
      %543 = vdwg.mxu0
      %v544 = vld [vmem:[%s350] sm:$0xff]
      %v545 = vld [vmem:[%s350 + $0x8] sm:$0xff]
      %v546 = vld [vmem:[%s350 + $0x10] sm:$0xff]
      %v547 = vld [vmem:[%s350 + $0x18] sm:$0xff]
      %v548 = vld [vmem:[%s350 + $0x20] sm:$0xff]
      %v549 = vld [vmem:[%s350 + $0x28] sm:$0xff]
      %v550 = vld [vmem:[%s350 + $0x30] sm:$0xff]
      %v551 = vld [vmem:[%s350 + $0x38] sm:$0xff]
      %v552 = vld [vmem:[%s350 + $0x40] sm:$0xff]
      %v553 = vld [vmem:[%s350 + $0x48] sm:$0xff]
      %v554 = vld [vmem:[%s350 + $0x50] sm:$0xff]
      %v555 = vld [vmem:[%s350 + $0x58] sm:$0xff]
      %v556 = vld [vmem:[%s350 + $0x60] sm:$0xff]
      %v557 = vld [vmem:[%s350 + $0x68] sm:$0xff]
      %v558 = vld [vmem:[%s350 + $0x70] sm:$0xff]
      %v559 = vld [vmem:[%s350 + $0x78] sm:$0xff]
      %v560 = vpack.c.bf16 %v545, %v544
      %v561 = vpack.c.bf16 %v547, %v546
      %v562 = vpack.c.bf16 %v549, %v548
      %v563 = vpack.c.bf16 %v551, %v550
      %v564 = vpack.c.bf16 %v553, %v552
      %v565 = vpack.c.bf16 %v555, %v554
      %v566 = vpack.c.bf16 %v557, %v556
      %v567 = vpack.c.bf16 %v559, %v558
      %v568 = vld [vmem:[%s4] sm:$0xf]
      %v569 = vld [vmem:[%s4 + $0x4] sm:$0xf]
      %v570 = vld [vmem:[%s5] sm:$0x1]
      %v572 = vlaneseq
      %v573 = vshrl.u32 %v572, 7
      %v574 = vsub.s32 0, %v573
      %v575 = vrot.slane %v570, %v574
      %v579 = vunpack.c.l.b16 %v568
      %v580 = vunpack.c.l.b16 %v569
      %v581 = vpack.c.b16 %v580, %v579
      %vm583 = vcmask 130048
      %v585 = vsel %vm583, %v560, 0
      %v588 = vsel %vm583, %v561, 0
      %v591 = vsel %vm583, %v562, 0
      %v594 = vsel %vm583, %v563, 0
      %v597 = vsel %vm583, %v564, 0
      %v600 = vsel %vm583, %v565, 0
      %v603 = vsel %vm583, %v566, 0
      %v606 = vsel %vm583, %v567, 0
      %608 = vmatprep.subr.bf16.mxu0 0
      %609 = vmatpush1.bf16.msra.mxu0 %v581
      %610 = vmatprep.subr.bf16.mxu0 0
      %611 = vmatpush1.bf16.msra.mxu0 0
      %612 = vmatprep.subr.bf16.mxu0 0
      %613 = vmatpush1.bf16.msra.mxu0 0
      %614 = vmatprep.subr.bf16.mxu0 0
      %615 = vmatpush1.bf16.msra.mxu0 0
      %616 = vmatprep.subr.bf16.mxu0 0
      %617 = vmatpush1.bf16.msra.mxu0 0
      %618 = vmatprep.subr.bf16.mxu0 0
      %619 = vmatpush1.bf16.msra.mxu0 0
      %620 = vmatprep.subr.bf16.mxu0 0
      %621 = vmatpush1.bf16.msra.mxu0 0
      %622 = vmatprep.subr.bf16.mxu0 0
      %623 = vmatpush1.bf16.msra.mxu0 0
      %624 = vmatprep.subr.bf16.mxu0 0
      %625 = vmatpush1.bf16.msra.mxu0 0
      %626 = vmatprep.subr.bf16.mxu0 0
      %627 = vmatpush1.bf16.msra.mxu0 0
      %628 = vmatprep.subr.bf16.mxu0 0
      %629 = vmatpush1.bf16.msra.mxu0 0
      %630 = vmatprep.subr.bf16.mxu0 0
      %631 = vmatpush1.bf16.msra.mxu0 0
      %632 = vmatprep.subr.bf16.mxu0 0
      %633 = vmatpush1.bf16.msra.mxu0 0
      %634 = vmatprep.subr.bf16.mxu0 0
      %635 = vmatpush1.bf16.msra.mxu0 0
      %636 = vmatprep.subr.bf16.mxu0 0
      %637 = vmatpush1.bf16.msra.mxu0 0
      %638 = vmatprep.subr.bf16.mxu0 0
      %639 = vmatpush1.bf16.msra.mxu0 0
      %640 = vmatprep.mubr.bf16.mxu0 0
      %641 = vmatmul.mubr.bf16.gmra.mrb[0].mxu0 %v585
      %v642 = vpop.f32.mrb[0].mxu0
      %v643 = vadd.f32 %v575, %v642
      %v644 = vpop.f32.mrb[0].mxu0
      %v645 = vpop.f32.mrb[0].mxu0
      %v646 = vadd.f32 %v575, %v645
      %v647 = vpop.f32.mrb[0].mxu0
      %648 = vmatprep.mubr.bf16.mxu0 0
      %649 = vmatmul.mubr.bf16.gmra.mrb[0].mxu0 %v588
      %v650 = vpop.f32.mrb[0].mxu0
      %v651 = vadd.f32 %v575, %v650
      %v652 = vpop.f32.mrb[0].mxu0
      %v653 = vpop.f32.mrb[0].mxu0
      %v654 = vadd.f32 %v575, %v653
      %v655 = vpop.f32.mrb[0].mxu0
      %656 = vmatprep.mubr.bf16.mxu0 0
      %657 = vmatmul.mubr.bf16.gmra.mrb[0].mxu0 %v591
      %v658 = vpop.f32.mrb[0].mxu0
      %v659 = vadd.f32 %v575, %v658
      %v660 = vpop.f32.mrb[0].mxu0
      %v661 = vpop.f32.mrb[0].mxu0
      %v662 = vadd.f32 %v575, %v661
      %v663 = vpop.f32.mrb[0].mxu0
      %664 = vmatprep.mubr.bf16.mxu0 0
      %665 = vmatmul.mubr.bf16.gmra.mrb[0].mxu0 %v594
      %v666 = vpop.f32.mrb[0].mxu0
      %v667 = vadd.f32 %v575, %v666
      %v668 = vpop.f32.mrb[0].mxu0
      %v669 = vpop.f32.mrb[0].mxu0
      %v670 = vadd.f32 %v575, %v669
      %v671 = vpop.f32.mrb[0].mxu0
      %672 = vmatprep.mubr.bf16.mxu0 0
      %673 = vmatmul.mubr.bf16.gmra.mrb[0].mxu0 %v597
      %v674 = vpop.f32.mrb[0].mxu0
      %v675 = vadd.f32 %v575, %v674
      %v676 = vpop.f32.mrb[0].mxu0
      %v677 = vpop.f32.mrb[0].mxu0
      %v678 = vadd.f32 %v575, %v677
      %v679 = vpop.f32.mrb[0].mxu0
      %680 = vmatprep.mubr.bf16.mxu0 0
      %681 = vmatmul.mubr.bf16.gmra.mrb[0].mxu0 %v600
      %v682 = vpop.f32.mrb[0].mxu0
      %v683 = vadd.f32 %v575, %v682
      %v684 = vpop.f32.mrb[0].mxu0
      %v685 = vpop.f32.mrb[0].mxu0
      %v686 = vadd.f32 %v575, %v685
      %v687 = vpop.f32.mrb[0].mxu0
      %688 = vmatprep.mubr.bf16.mxu0 0
      %689 = vmatmul.mubr.bf16.gmra.mrb[0].mxu0 %v603
      %v690 = vpop.f32.mrb[0].mxu0
      %v691 = vadd.f32 %v575, %v690
      %v692 = vpop.f32.mrb[0].mxu0
      %v693 = vpop.f32.mrb[0].mxu0
      %v694 = vadd.f32 %v575, %v693
      %v695 = vpop.f32.mrb[0].mxu0
      %696 = vmatprep.mubr.bf16.mxu0 0
      %697 = vmatmul.mubr.bf16.gmra.mrb[0].mxu0 %v606
      %v698 = vpop.f32.mrb[0].mxu0
      %v699 = vadd.f32 %v575, %v698
      %v700 = vpop.f32.mrb[0].mxu0
      %v701 = vpop.f32.mrb[0].mxu0
      %v702 = vadd.f32 %v575, %v701
      %v703 = vpop.f32.mrb[0].mxu0
      %704 = vdwg.mxu0
      %v705 = vmax.f32 %v643, 0.0
      %v706 = vmax.f32 %v646, 0.0
      %v707 = vmax.f32 %v651, 0.0
      %v708 = vmax.f32 %v654, 0.0
      %v709 = vmax.f32 %v659, 0.0
      %v710 = vmax.f32 %v662, 0.0
      %v711 = vmax.f32 %v667, 0.0
      %v712 = vmax.f32 %v670, 0.0
      %v713 = vmax.f32 %v675, 0.0
      %v714 = vmax.f32 %v678, 0.0
      %v715 = vmax.f32 %v683, 0.0
      %v716 = vmax.f32 %v686, 0.0
      %v717 = vmax.f32 %v691, 0.0
      %v718 = vmax.f32 %v694, 0.0
      %v719 = vmax.f32 %v699, 0.0
      %v720 = vmax.f32 %v702, 0.0
      %v721 = vmax.f32 %v482, 0.0
      %v722 = vmax.f32 %v485, 0.0
      %v723 = vmax.f32 %v490, 0.0
      %v724 = vmax.f32 %v493, 0.0
      %v725 = vmax.f32 %v498, 0.0
      %v726 = vmax.f32 %v501, 0.0
      %v727 = vmax.f32 %v506, 0.0
      %v728 = vmax.f32 %v509, 0.0
      %v729 = vmax.f32 %v514, 0.0
      %v730 = vmax.f32 %v517, 0.0
      %v731 = vmax.f32 %v522, 0.0
      %v732 = vmax.f32 %v525, 0.0
      %v733 = vmax.f32 %v530, 0.0
      %v734 = vmax.f32 %v533, 0.0
      %v735 = vmax.f32 %v538, 0.0
      %v736 = vmax.f32 %v541, 0.0
      %v737 = vpack.c.bf16 %v722, %v721
      %v738 = vpack.c.bf16 %v724, %v723
      %v739 = vpack.c.bf16 %v726, %v725
      %v740 = vpack.c.bf16 %v728, %v727
      %v741 = vpack.c.bf16 %v730, %v729
      %v742 = vpack.c.bf16 %v732, %v731
      %v743 = vpack.c.bf16 %v734, %v733
      %v744 = vpack.c.bf16 %v736, %v735
      %v745 = vld [vmem:[%s6] sm:$0xf]
      %v746 = vld [vmem:[%s6 + $0x4] sm:$0xf]
      %v747 = vld [vmem:[%s6 + $0x8] sm:$0xf]
      %v748 = vld [vmem:[%s6 + $0xc] sm:$0xf]
      %v749 = vpack.c.bf16 %v706, %v705
      %v750 = vpack.c.bf16 %v708, %v707
      %v751 = vpack.c.bf16 %v710, %v709
      %v752 = vpack.c.bf16 %v712, %v711
      %v753 = vpack.c.bf16 %v714, %v713
      %v754 = vpack.c.bf16 %v716, %v715
      %v755 = vpack.c.bf16 %v718, %v717
      %v756 = vpack.c.bf16 %v720, %v719
      %v757 = vld [vmem:[%s7] sm:$0xf]
      %v758 = vld [vmem:[%s7 + $0x4] sm:$0xf]
      %v759 = vld [vmem:[%s7 + $0x8] sm:$0xf]
      %v760 = vld [vmem:[%s7 + $0xc] sm:$0xf]
      %v765 = vunpack.c.l.b16 %v757
      %v766 = vunpack.c.l.b16 %v758
      %v767 = vunpack.c.l.b16 %v759
      %v768 = vunpack.c.l.b16 %v760
      %v769 = vpack.c.b16 %v766, %v765
      %v770 = vpack.c.b16 %v768, %v767
      %v774 = vsel %vm422, %v749, 0
      %v777 = vsel %vm422, %v750, 0
      %v780 = vsel %vm422, %v751, 0
      %v783 = vsel %vm422, %v752, 0
      %v786 = vsel %vm422, %v753, 0
      %v789 = vsel %vm422, %v754, 0
      %v792 = vsel %vm422, %v755, 0
      %v795 = vsel %vm422, %v756, 0
      %797 = vmatprep.subr.bf16.mxu0 0
      %798 = vmatpush1.bf16.msra.mxu0 %v769
      %799 = vmatprep.subr.bf16.mxu0 0
      %800 = vmatpush1.bf16.msra.mxu0 %v770
      %801 = vmatprep.subr.bf16.mxu0 0
      %802 = vmatpush1.bf16.msra.mxu0 0
      %803 = vmatprep.subr.bf16.mxu0 0
      %804 = vmatpush1.bf16.msra.mxu0 0
      %805 = vmatprep.subr.bf16.mxu0 0
      %806 = vmatpush1.bf16.msra.mxu0 0
      %807 = vmatprep.subr.bf16.mxu0 0
      %808 = vmatpush1.bf16.msra.mxu0 0
      %809 = vmatprep.subr.bf16.mxu0 0
      %810 = vmatpush1.bf16.msra.mxu0 0
      %811 = vmatprep.subr.bf16.mxu0 0
      %812 = vmatpush1.bf16.msra.mxu0 0
      %813 = vmatprep.subr.bf16.mxu0 0
      %814 = vmatpush1.bf16.msra.mxu0 0
      %815 = vmatprep.subr.bf16.mxu0 0
      %816 = vmatpush1.bf16.msra.mxu0 0
      %817 = vmatprep.subr.bf16.mxu0 0
      %818 = vmatpush1.bf16.msra.mxu0 0
      %819 = vmatprep.subr.bf16.mxu0 0
      %820 = vmatpush1.bf16.msra.mxu0 0
      %821 = vmatprep.subr.bf16.mxu0 0
      %822 = vmatpush1.bf16.msra.mxu0 0
      %823 = vmatprep.subr.bf16.mxu0 0
      %824 = vmatpush1.bf16.msra.mxu0 0
      %825 = vmatprep.subr.bf16.mxu0 0
      %826 = vmatpush1.bf16.msra.mxu0 0
      %827 = vmatprep.subr.bf16.mxu0 0
      %828 = vmatpush1.bf16.msra.mxu0 0
      %829 = vmatprep.mubr.bf16.mxu0 0
      %830 = vmatmul.mubr.bf16.gmra.mrb[0].mxu0 %v774
      %v831 = vpop.f32.mrb[0].mxu0
      %v832 = vadd.f32 0.0, %v831
      %v833 = vpop.f32.mrb[0].mxu0
      %v834 = vpop.f32.mrb[0].mxu0
      %v835 = vadd.f32 0.0, %v834
      %v836 = vpop.f32.mrb[0].mxu0
      %837 = vmatprep.mubr.bf16.mxu0 0
      %838 = vmatmul.mubr.bf16.gmra.mrb[0].mxu0 %v777
      %v839 = vpop.f32.mrb[0].mxu0
      %v840 = vadd.f32 0.0, %v839
      %v841 = vpop.f32.mrb[0].mxu0
      %v842 = vpop.f32.mrb[0].mxu0
      %v843 = vadd.f32 0.0, %v842
      %v844 = vpop.f32.mrb[0].mxu0
      %845 = vmatprep.mubr.bf16.mxu0 0
      %846 = vmatmul.mubr.bf16.gmra.mrb[0].mxu0 %v780
      %v847 = vpop.f32.mrb[0].mxu0
      %v848 = vadd.f32 0.0, %v847
      %v849 = vpop.f32.mrb[0].mxu0
      %v850 = vpop.f32.mrb[0].mxu0
      %v851 = vadd.f32 0.0, %v850
      %v852 = vpop.f32.mrb[0].mxu0
      %853 = vmatprep.mubr.bf16.mxu0 0
      %854 = vmatmul.mubr.bf16.gmra.mrb[0].mxu0 %v783
      %v855 = vpop.f32.mrb[0].mxu0
      %v856 = vadd.f32 0.0, %v855
      %v857 = vpop.f32.mrb[0].mxu0
      %v858 = vpop.f32.mrb[0].mxu0
      %v859 = vadd.f32 0.0, %v858
      %v860 = vpop.f32.mrb[0].mxu0
      %861 = vmatprep.mubr.bf16.mxu0 0
      %862 = vmatmul.mubr.bf16.gmra.mrb[0].mxu0 %v786
      %v863 = vpop.f32.mrb[0].mxu0
      %v864 = vadd.f32 0.0, %v863
      %v865 = vpop.f32.mrb[0].mxu0
      %v866 = vpop.f32.mrb[0].mxu0
      %v867 = vadd.f32 0.0, %v866
      %v868 = vpop.f32.mrb[0].mxu0
      %869 = vmatprep.mubr.bf16.mxu0 0
      %870 = vmatmul.mubr.bf16.gmra.mrb[0].mxu0 %v789
      %v871 = vpop.f32.mrb[0].mxu0
      %v872 = vadd.f32 0.0, %v871
      %v873 = vpop.f32.mrb[0].mxu0
      %v874 = vpop.f32.mrb[0].mxu0
      %v875 = vadd.f32 0.0, %v874
      %v876 = vpop.f32.mrb[0].mxu0
      %877 = vmatprep.mubr.bf16.mxu0 0
      %878 = vmatmul.mubr.bf16.gmra.mrb[0].mxu0 %v792
      %v879 = vpop.f32.mrb[0].mxu0
      %v880 = vadd.f32 0.0, %v879
      %v881 = vpop.f32.mrb[0].mxu0
      %v882 = vpop.f32.mrb[0].mxu0
      %v883 = vadd.f32 0.0, %v882
      %v884 = vpop.f32.mrb[0].mxu0
      %885 = vmatprep.mubr.bf16.mxu0 0
      %886 = vmatmul.mubr.bf16.gmra.mrb[0].mxu0 %v795
      %v887 = vpop.f32.mrb[0].mxu0
      %v888 = vadd.f32 0.0, %v887
      %v889 = vpop.f32.mrb[0].mxu0
      %v890 = vpop.f32.mrb[0].mxu0
      %v891 = vadd.f32 0.0, %v890
      %v892 = vpop.f32.mrb[0].mxu0
      %893 = vdwg.mxu0
      %v898 = vunpack.c.l.b16 %v745
      %v899 = vunpack.c.l.b16 %v746
      %v900 = vunpack.c.l.b16 %v747
      %v901 = vunpack.c.l.b16 %v748
      %v902 = vpack.c.b16 %v899, %v898
      %v903 = vpack.c.b16 %v901, %v900
      %v907 = vsel %vm422, %v737, 0
      %v910 = vsel %vm422, %v738, 0
      %v913 = vsel %vm422, %v739, 0
      %v916 = vsel %vm422, %v740, 0
      %v919 = vsel %vm422, %v741, 0
      %v922 = vsel %vm422, %v742, 0
      %v925 = vsel %vm422, %v743, 0
      %v928 = vsel %vm422, %v744, 0
      %930 = vmatprep.subr.bf16.mxu0 0
      %931 = vmatpush1.bf16.msra.mxu0 %v902
      %932 = vmatprep.subr.bf16.mxu0 0
      %933 = vmatpush1.bf16.msra.mxu0 %v903
      %934 = vmatprep.subr.bf16.mxu0 0
      %935 = vmatpush1.bf16.msra.mxu0 0
      %936 = vmatprep.subr.bf16.mxu0 0
      %937 = vmatpush1.bf16.msra.mxu0 0
      %938 = vmatprep.subr.bf16.mxu0 0
      %939 = vmatpush1.bf16.msra.mxu0 0
      %940 = vmatprep.subr.bf16.mxu0 0
      %941 = vmatpush1.bf16.msra.mxu0 0
      %942 = vmatprep.subr.bf16.mxu0 0
      %943 = vmatpush1.bf16.msra.mxu0 0
      %944 = vmatprep.subr.bf16.mxu0 0
      %945 = vmatpush1.bf16.msra.mxu0 0
      %946 = vmatprep.subr.bf16.mxu0 0
      %947 = vmatpush1.bf16.msra.mxu0 0
      %948 = vmatprep.subr.bf16.mxu0 0
      %949 = vmatpush1.bf16.msra.mxu0 0
      %950 = vmatprep.subr.bf16.mxu0 0
      %951 = vmatpush1.bf16.msra.mxu0 0
      %952 = vmatprep.subr.bf16.mxu0 0
      %953 = vmatpush1.bf16.msra.mxu0 0
      %954 = vmatprep.subr.bf16.mxu0 0
      %955 = vmatpush1.bf16.msra.mxu0 0
      %956 = vmatprep.subr.bf16.mxu0 0
      %957 = vmatpush1.bf16.msra.mxu0 0
      %958 = vmatprep.subr.bf16.mxu0 0
      %959 = vmatpush1.bf16.msra.mxu0 0
      %960 = vmatprep.subr.bf16.mxu0 0
      %961 = vmatpush1.bf16.msra.mxu0 0
      %962 = vmatprep.mubr.bf16.mxu0 0
      %963 = vmatmul.mubr.bf16.gmra.mrb[0].mxu0 %v907
      %v964 = vpop.f32.mrb[0].mxu0
      %v965 = vadd.f32 %v832, %v964
      %v966 = vpop.f32.mrb[0].mxu0
      %v967 = vpop.f32.mrb[0].mxu0
      %v968 = vadd.f32 %v835, %v967
      %v969 = vpop.f32.mrb[0].mxu0
      %970 = vmatprep.mubr.bf16.mxu0 0
      %971 = vmatmul.mubr.bf16.gmra.mrb[0].mxu0 %v910
      %v972 = vpop.f32.mrb[0].mxu0
      %v973 = vadd.f32 %v840, %v972
      %v974 = vpop.f32.mrb[0].mxu0
      %v975 = vpop.f32.mrb[0].mxu0
      %v976 = vadd.f32 %v843, %v975
      %v977 = vpop.f32.mrb[0].mxu0
      %978 = vmatprep.mubr.bf16.mxu0 0
      %979 = vmatmul.mubr.bf16.gmra.mrb[0].mxu0 %v913
      %v980 = vpop.f32.mrb[0].mxu0
      %v981 = vadd.f32 %v848, %v980
      %v982 = vpop.f32.mrb[0].mxu0
      %v983 = vpop.f32.mrb[0].mxu0
      %v984 = vadd.f32 %v851, %v983
      %v985 = vpop.f32.mrb[0].mxu0
      %986 = vmatprep.mubr.bf16.mxu0 0
      %987 = vmatmul.mubr.bf16.gmra.mrb[0].mxu0 %v916
      %v988 = vpop.f32.mrb[0].mxu0
      %v989 = vadd.f32 %v856, %v988
      %v990 = vpop.f32.mrb[0].mxu0
      %v991 = vpop.f32.mrb[0].mxu0
      %v992 = vadd.f32 %v859, %v991
      %v993 = vpop.f32.mrb[0].mxu0
      %994 = vmatprep.mubr.bf16.mxu0 0
      %995 = vmatmul.mubr.bf16.gmra.mrb[0].mxu0 %v919
      %v996 = vpop.f32.mrb[0].mxu0
      %v997 = vadd.f32 %v864, %v996
      %v998 = vpop.f32.mrb[0].mxu0
      %v999 = vpop.f32.mrb[0].mxu0
      %v1000 = vadd.f32 %v867, %v999
      %v1001 = vpop.f32.mrb[0].mxu0
      %1002 = vmatprep.mubr.bf16.mxu0 0
      %1003 = vmatmul.mubr.bf16.gmra.mrb[0].mxu0 %v922
      %v1004 = vpop.f32.mrb[0].mxu0
      %v1005 = vadd.f32 %v872, %v1004
      %v1006 = vpop.f32.mrb[0].mxu0
      %v1007 = vpop.f32.mrb[0].mxu0
      %v1008 = vadd.f32 %v875, %v1007
      %v1009 = vpop.f32.mrb[0].mxu0
      %1010 = vmatprep.mubr.bf16.mxu0 0
      %1011 = vmatmul.mubr.bf16.gmra.mrb[0].mxu0 %v925
      %v1012 = vpop.f32.mrb[0].mxu0
      %v1013 = vadd.f32 %v880, %v1012
      %v1014 = vpop.f32.mrb[0].mxu0
      %v1015 = vpop.f32.mrb[0].mxu0
      %v1016 = vadd.f32 %v883, %v1015
      %v1017 = vpop.f32.mrb[0].mxu0
      %1018 = vmatprep.mubr.bf16.mxu0 0
      %1019 = vmatmul.mubr.bf16.gmra.mrb[0].mxu0 %v928
      %v1020 = vpop.f32.mrb[0].mxu0
      %v1021 = vadd.f32 %v888, %v1020
      %v1022 = vpop.f32.mrb[0].mxu0
      %v1023 = vpop.f32.mrb[0].mxu0
      %v1024 = vadd.f32 %v891, %v1023
      %v1025 = vpop.f32.mrb[0].mxu0
      %1026 = vdwg.mxu0
      %v1027 = vld [vmem:[%s8] sm:$0x1]
      %v1029 = vlaneseq
      %v1030 = vshrl.u32 %v1029, 7
      %v1031 = vsub.s32 0, %v1030
      %v1032 = vrot.slane %v1027, %v1031
      %v1034 = vadd.f32 %v965, %v1032
      %v1035 = vadd.f32 %v968, %v1032
      %v1036 = vadd.f32 %v973, %v1032
      %v1037 = vadd.f32 %v976, %v1032
      %v1038 = vadd.f32 %v981, %v1032
      %v1039 = vadd.f32 %v984, %v1032
      %v1040 = vadd.f32 %v989, %v1032
      %v1041 = vadd.f32 %v992, %v1032
      %v1042 = vadd.f32 %v997, %v1032
      %v1043 = vadd.f32 %v1000, %v1032
      %v1044 = vadd.f32 %v1005, %v1032
      %v1045 = vadd.f32 %v1008, %v1032
      %v1046 = vadd.f32 %v1013, %v1032
      %v1047 = vadd.f32 %v1016, %v1032
      %v1048 = vadd.f32 %v1021, %v1032
      %v1049 = vadd.f32 %v1024, %v1032
      %v1050 = vadd.f32 %v359, %v1034
      %v1051 = vadd.f32 %v360, %v1035
      %v1052 = vadd.f32 %v361, %v1036
      %v1053 = vadd.f32 %v362, %v1037
      %v1054 = vadd.f32 %v363, %v1038
      %v1055 = vadd.f32 %v364, %v1039
      %v1056 = vadd.f32 %v365, %v1040
      %v1057 = vadd.f32 %v366, %v1041
      %v1058 = vadd.f32 %v367, %v1042
      %v1059 = vadd.f32 %v368, %v1043
      %v1060 = vadd.f32 %v369, %v1044
      %v1061 = vadd.f32 %v370, %v1045
      %v1062 = vadd.f32 %v371, %v1046
      %v1063 = vadd.f32 %v372, %v1047
      %v1064 = vadd.f32 %v373, %v1048
      %v1065 = vadd.f32 %v374, %v1049
      %1066 = vst.msk [vmem:[%s356] sm:$0xff] %vm422, %v1050
      %1067 = vst.msk [vmem:[%s356 + $0x8] sm:$0xff] %vm422, %v1051
      %1068 = vst.msk [vmem:[%s356 + $0x10] sm:$0xff] %vm422, %v1052
      %1069 = vst.msk [vmem:[%s356 + $0x18] sm:$0xff] %vm422, %v1053
      %1070 = vst.msk [vmem:[%s356 + $0x20] sm:$0xff] %vm422, %v1054
      %1071 = vst.msk [vmem:[%s356 + $0x28] sm:$0xff] %vm422, %v1055
      %1072 = vst.msk [vmem:[%s356 + $0x30] sm:$0xff] %vm422, %v1056
      %1073 = vst.msk [vmem:[%s356 + $0x38] sm:$0xff] %vm422, %v1057
      %1074 = vst.msk [vmem:[%s356 + $0x40] sm:$0xff] %vm422, %v1058
      %1075 = vst.msk [vmem:[%s356 + $0x48] sm:$0xff] %vm422, %v1059
      %1076 = vst.msk [vmem:[%s356 + $0x50] sm:$0xff] %vm422, %v1060
      %1077 = vst.msk [vmem:[%s356 + $0x58] sm:$0xff] %vm422, %v1061
      %1078 = vst.msk [vmem:[%s356 + $0x60] sm:$0xff] %vm422, %v1062
      %1079 = vst.msk [vmem:[%s356 + $0x68] sm:$0xff] %vm422, %v1063
      %1080 = vst.msk [vmem:[%s356 + $0x70] sm:$0xff] %vm422, %v1064
      %1081 = vst.msk [vmem:[%s356 + $0x78] sm:$0xff] %vm422, %v1065
      %s1082 = smul.u32 16, %s20
      %p1083 = scmp.lt.s32.totalorder %s1082, 31
      %s1084 = scalar_select %p1083, %s1082, 31
      %s1085 = smul.addr %s1084, 8
      %s1086 = scalar_lea.vmem %s9, %s1085
      // Predicated region
      $region57: #{residual_block.1} parent=55 // pred_check
        %p1087 = pneg %p237
      $region58: #{residual_block.1} parent=55 // pred_check_branch
        %1089 = sbr.rel (%p1087) target = $region60
      $region59: #{residual_block.1} parent=55 // pred_region
        %s1090 = smul.u32 16, %s20
      $region60: #{residual_block.1} parent=55 // pred_fallthru
        _
    $region56: #{residual_block.1} parent=5 // pred_fallthru
      _
    %p1091 = scmp.le.s32.totalorder 2, %s15
    // Predicated region
    $region61: #{residual_block.1} parent=5 // pred_check
      %p1092 = pneg %p1091
    $region62: #{residual_block.1} parent=5 // pred_check_branch
      %1094 = sbr.rel (%p1092) target = $region64
    $region63: #{residual_block.1} parent=5 // pred_region
      %s1095 = ssub.s32 %s15, 2
      // Predicated region
      $region65: #{residual_block.1} parent=63 // pred_check
        %p1096 = pneg %p243
      $region66: #{residual_block.1} parent=63 // pred_check_branch
        %1098 = sbr.rel (%p1096) target = $region68
      $region67: #{residual_block.1} parent=63 // pred_region
        %s1099 = smul.u32 16, %s21
        %p1100 = scmp.lt.s32.totalorder %s1099, 31
        %s1101 = scalar_select %p1100, %s1099, 31
        %s1102 = smul.addr %s1101, 8
        %s1103 = scalar_lea.vmem %s9, %s1102
      $region68: #{residual_block.1} parent=63 // pred_fallthru
        _
    $region64: #{residual_block.1} parent=5 // pred_fallthru
      _
  $region6: #{residual_block.1} parent=0 // loop_footer
    %s19 = sadd.s32 1, %s15
  $region7: #{residual_block.1} parent=0 // loop_footer_branch
    %14 = sbr.rel target = $region3
  $region8: #{residual_block.1} parent=0 // loop_exit
    _

</llo_original>
